<compile_context>
chip_gen: v5e
topology: v5e:2x2
jax: 0.10.0
libtpu: 0.0.40
codegen_flags: <defaults>
</compile_context>

<pallas_src>
import functools

import jax
import jax.numpy as jnp
from jax.experimental import pallas as pl
from jax.experimental.pallas import tpu as pltpu


def _conv3x3_gelu_kernel(x2d_ref, w_ref, b_ref, out_ref, xflat_s, slab_s, *,
                         C, H, W, KH, KW, Wp, MW):
    # x2d : (C, H*W)       raw image, rows raster-flattened (free reshape of NCHW)
    # w   : (OC, C*KH*KW)  free reshape of PyTorch (OC, IC, KH, KW) -> k = c*9+kh*3+kw
    # b   : (OC, 1)
    # out : (OC, H*W)      dense raster output (free reshape back to NCHW outside)
    # xflat_s: (C, (H+3)*Wp) scratch: zero-padded image flattened over (row, col)
    # slab_s : (C*KH*KW, MW) scratch: fused im2col slab, MW = H*Wp

    # ---- stage 1: zero-padded, row-flattened image in VMEM scratch ----------
    LF = xflat_s.shape[1]
    xflat_s[...] = jnp.zeros((C, LF), dtype=xflat_s.dtype)
    x2d = x2d_ref[...]
    for h in range(H):
        dst = (h + 1) * Wp + 1                      # 1 pad row on top, 1 pad col left
        xflat_s[:, dst:dst + W] = x2d[:, h * W:(h + 1) * W]

    # ---- stage 2: fused im2col slab (one contiguous shifted slice per tap) --
    xflat = xflat_s[...]
    for c in range(C):
        for kh in range(KH):
            for kw in range(KW):
                k = c * (KH * KW) + kh * KW + kw     # channel-major: matches w reshape
                off = kh * Wp + kw
                slab_s[k:k + 1, :] = xflat[c:c + 1, off:off + MW]

    # ---- stage 3: ONE MXU matmul + bias --------------------------------------
    acc = jnp.dot(w_ref[...], slab_s[...], preferred_element_type=jnp.float32)
    acc = acc + b_ref[...]                           # (OC,1) broadcast over lanes

    # ---- stage 4: tanh-GELU (constants folded, same math as the module) -----
    c1 = 0.7978845608028654
    c2 = 0.044715 * 0.7978845608028654
    t = jnp.tanh(acc * (c1 + c2 * (acc * acc)))
    act = (0.5 * acc) * (1.0 + t)

    # ---- stage 5: drop the wrap columns -> dense (OC, H*W) raster ------------
    for h in range(H):
        out_ref[:, h * W:(h + 1) * W] = act[:, h * Wp:h * Wp + W].astype(out_ref.dtype)


def conv2d_gelu_pallas(x_nchw, weight, bias):
    """x_nchw: (1, C, H, W); weight: (OC, IC, 3, 3) [PyTorch layout]; bias: (OC,)."""
    N, C, H, W = x_nchw.shape
    OC, IC, KH, KW = weight.shape
    assert N == 1 and IC == C and (KH, KW) == (3, 3)

    Wp = W + 4                # wide row stride (>= W+2 needed; W+4 -> 16 lanes here)
    MW = H * Wp               # wide flattened length per channel (256)
    LF = (H + 3) * Wp         # flattened padded-image length (1 top + 2 bottom pad rows)
    K = IC * KH * KW          # fused contraction size (27)

    # Wrapper-side ops are all layout-preserving reshapes (bitcasts, no kernels).
    x2d = x_nchw.reshape(C, H * W).astype(jnp.float32)
    w2 = weight.reshape(OC, K).astype(jnp.float32)          # k = c*9 + kh*3 + kw
    b2 = bias.reshape(OC, 1).astype(jnp.float32)

    kernel = functools.partial(_conv3x3_gelu_kernel,
                               C=C, H=H, W=W, KH=KH, KW=KW, Wp=Wp, MW=MW)

    out2d = pl.pallas_call(
        kernel,
        out_shape=jax.ShapeDtypeStruct((OC, H * W), jnp.float32),
        in_specs=[pl.BlockSpec(memory_space=pltpu.MemorySpace.VMEM)] * 3,
        out_specs=pl.BlockSpec(memory_space=pltpu.MemorySpace.VMEM),
        scratch_shapes=[pltpu.VMEM((C, LF), jnp.float32),
                        pltpu.VMEM((K, MW), jnp.float32)],
        cost_estimate=pl.CostEstimate(
            flops=2 * OC * K * MW,
            transcendentals=OC * MW,
            bytes_accessed=4 * (C * H * W + OC * K + OC + OC * H * W)),
    )(x2d, w2, b2)

    return out2d.reshape(1, OC, H, W)                        # bitcast back to NCHW


def reference(x_nchw, weight, bias):
    v1 = jax.lax.conv_general_dilated(
        x_nchw, weight, window_strides=(1, 1), padding=((1, 1), (1, 1)),
        dimension_numbers=("NCHW", "OIHW", "NCHW"))
    v1 = v1 + bias.reshape(1, -1, 1, 1)
    v2 = v1 * 0.5
    v7 = (v1 + (v1 * v1 * v1) * 0.044715) * 0.7978845608028654
    return v2 * (jnp.tanh(v7) + 1.0)


if __name__ == "__main__":
    key = jax.random.PRNGKey(0)
    kx, kw_, kb = jax.random.split(key, 3)

    # Shapes consistent with the PyTorch module: x5 = randn(1, 3, 16, 12)
    x = jax.random.normal(kx, (1, 3, 16, 12), dtype=jnp.float32)
    weight = jax.random.normal(kw_, (11, 3, 3, 3), dtype=jnp.float32) * 0.1
    bias = jax.random.normal(kb, (11,), dtype=jnp.float32) * 0.1

    fn = jax.jit(conv2d_gelu_pallas)
    out = jax.block_until_ready(fn(x, weight, bias))
    ref = jax.block_until_ready(reference(x, weight, bias))

    assert out.shape == (1, 11, 16, 12)
    assert jnp.allclose(out, ref, atol=2e-3, rtol=2e-3), "mismatch vs reference"

    print("KERNEL_OK")
</pallas_src>

<mosaic_0001>
module attributes {stable_mosaic.version = 11 : i64} {
  func.func @_conv3x3_gelu_kernel(%arg0: memref<3x192xf32, #tpu.memory_space<vmem>>, %arg1: memref<11x27xf32, #tpu.memory_space<vmem>>, %arg2: memref<11x1xf32, #tpu.memory_space<vmem>>, %arg3: memref<11x192xf32, #tpu.memory_space<vmem>>, %arg4: memref<3x304xf32, #tpu.memory_space<vmem>>, %arg5: memref<27x256xf32, #tpu.memory_space<vmem>>) attributes {dimension_semantics = [], scalar_prefetch = 0 : i64, scratch_operands = 2 : i64, tpu.core_type = #tpu.core_type<tc>} {
    %cst = arith.constant 0.000000e+00 : f32
    %0 = vector.broadcast %cst : f32 to vector<3x304xf32>
    %c0 = arith.constant 0 : index
    %c0_0 = arith.constant 0 : index
    %1 = vector.load %arg4[%c0, %c0_0] : memref<3x304xf32, #tpu.memory_space<vmem>>, vector<3x304xf32>
    tpu.vector_store %arg4[%c0, %c0_0], %0 {strides = array<i32>} : memref<3x304xf32, #tpu.memory_space<vmem>>, vector<3x304xf32>,
    %c0_1 = arith.constant 0 : index
    %c0_2 = arith.constant 0 : index
    %2 = vector.load %arg0[%c0_1, %c0_2] : memref<3x192xf32, #tpu.memory_space<vmem>>, vector<3x192xf32>
    %3 = vector.extract_strided_slice %2 {offsets = [0, 0], sizes = [3, 12], strides = [1, 1]} : vector<3x192xf32> to vector<3x12xf32>
    %c0_3 = arith.constant 0 : index
    %c17 = arith.constant 17 : index
    %4 = vector.load %arg4[%c0_3, %c17] : memref<3x304xf32, #tpu.memory_space<vmem>>, vector<3x12xf32>
    tpu.vector_store %arg4[%c0_3, %c17], %3 {strides = array<i32>} : memref<3x304xf32, #tpu.memory_space<vmem>>, vector<3x12xf32>,
    %5 = vector.extract_strided_slice %2 {offsets = [0, 12], sizes = [3, 12], strides = [1, 1]} : vector<3x192xf32> to vector<3x12xf32>
    %c0_4 = arith.constant 0 : index
    %c33 = arith.constant 33 : index
    %6 = vector.load %arg4[%c0_4, %c33] : memref<3x304xf32, #tpu.memory_space<vmem>>, vector<3x12xf32>
    tpu.vector_store %arg4[%c0_4, %c33], %5 {strides = array<i32>} : memref<3x304xf32, #tpu.memory_space<vmem>>, vector<3x12xf32>,
    %7 = vector.extract_strided_slice %2 {offsets = [0, 24], sizes = [3, 12], strides = [1, 1]} : vector<3x192xf32> to vector<3x12xf32>
    %c0_5 = arith.constant 0 : index
    %c49 = arith.constant 49 : index
    %8 = vector.load %arg4[%c0_5, %c49] : memref<3x304xf32, #tpu.memory_space<vmem>>, vector<3x12xf32>
    tpu.vector_store %arg4[%c0_5, %c49], %7 {strides = array<i32>} : memref<3x304xf32, #tpu.memory_space<vmem>>, vector<3x12xf32>,
    %9 = vector.extract_strided_slice %2 {offsets = [0, 36], sizes = [3, 12], strides = [1, 1]} : vector<3x192xf32> to vector<3x12xf32>
    %c0_6 = arith.constant 0 : index
    %c65 = arith.constant 65 : index
    %10 = vector.load %arg4[%c0_6, %c65] : memref<3x304xf32, #tpu.memory_space<vmem>>, vector<3x12xf32>
    tpu.vector_store %arg4[%c0_6, %c65], %9 {strides = array<i32>} : memref<3x304xf32, #tpu.memory_space<vmem>>, vector<3x12xf32>,
    %11 = vector.extract_strided_slice %2 {offsets = [0, 48], sizes = [3, 12], strides = [1, 1]} : vector<3x192xf32> to vector<3x12xf32>
    %c0_7 = arith.constant 0 : index
    %c81 = arith.constant 81 : index
    %12 = vector.load %arg4[%c0_7, %c81] : memref<3x304xf32, #tpu.memory_space<vmem>>, vector<3x12xf32>
    tpu.vector_store %arg4[%c0_7, %c81], %11 {strides = array<i32>} : memref<3x304xf32, #tpu.memory_space<vmem>>, vector<3x12xf32>,
    %13 = vector.extract_strided_slice %2 {offsets = [0, 60], sizes = [3, 12], strides = [1, 1]} : vector<3x192xf32> to vector<3x12xf32>
    %c0_8 = arith.constant 0 : index
    %c97 = arith.constant 97 : index
    %14 = vector.load %arg4[%c0_8, %c97] : memref<3x304xf32, #tpu.memory_space<vmem>>, vector<3x12xf32>
    tpu.vector_store %arg4[%c0_8, %c97], %13 {strides = array<i32>} : memref<3x304xf32, #tpu.memory_space<vmem>>, vector<3x12xf32>,
    %15 = vector.extract_strided_slice %2 {offsets = [0, 72], sizes = [3, 12], strides = [1, 1]} : vector<3x192xf32> to vector<3x12xf32>
    %c0_9 = arith.constant 0 : index
    %c113 = arith.constant 113 : index
    %16 = vector.load %arg4[%c0_9, %c113] : memref<3x304xf32, #tpu.memory_space<vmem>>, vector<3x12xf32>
    tpu.vector_store %arg4[%c0_9, %c113], %15 {strides = array<i32>} : memref<3x304xf32, #tpu.memory_space<vmem>>, vector<3x12xf32>,
    %17 = vector.extract_strided_slice %2 {offsets = [0, 84], sizes = [3, 12], strides = [1, 1]} : vector<3x192xf32> to vector<3x12xf32>
    %c0_10 = arith.constant 0 : index
    %c129 = arith.constant 129 : index
    %18 = vector.load %arg4[%c0_10, %c129] : memref<3x304xf32, #tpu.memory_space<vmem>>, vector<3x12xf32>
    tpu.vector_store %arg4[%c0_10, %c129], %17 {strides = array<i32>} : memref<3x304xf32, #tpu.memory_space<vmem>>, vector<3x12xf32>,
    %19 = vector.extract_strided_slice %2 {offsets = [0, 96], sizes = [3, 12], strides = [1, 1]} : vector<3x192xf32> to vector<3x12xf32>
    %c0_11 = arith.constant 0 : index
    %c145 = arith.constant 145 : index
    %20 = vector.load %arg4[%c0_11, %c145] : memref<3x304xf32, #tpu.memory_space<vmem>>, vector<3x12xf32>
    tpu.vector_store %arg4[%c0_11, %c145], %19 {strides = array<i32>} : memref<3x304xf32, #tpu.memory_space<vmem>>, vector<3x12xf32>,
    %21 = vector.extract_strided_slice %2 {offsets = [0, 108], sizes = [3, 12], strides = [1, 1]} : vector<3x192xf32> to vector<3x12xf32>
    %c0_12 = arith.constant 0 : index
    %c161 = arith.constant 161 : index
    %22 = vector.load %arg4[%c0_12, %c161] : memref<3x304xf32, #tpu.memory_space<vmem>>, vector<3x12xf32>
    tpu.vector_store %arg4[%c0_12, %c161], %21 {strides = array<i32>} : memref<3x304xf32, #tpu.memory_space<vmem>>, vector<3x12xf32>,
    %23 = vector.extract_strided_slice %2 {offsets = [0, 120], sizes = [3, 12], strides = [1, 1]} : vector<3x192xf32> to vector<3x12xf32>
    %c0_13 = arith.constant 0 : index
    %c177 = arith.constant 177 : index
    %24 = vector.load %arg4[%c0_13, %c177] : memref<3x304xf32, #tpu.memory_space<vmem>>, vector<3x12xf32>
    tpu.vector_store %arg4[%c0_13, %c177], %23 {strides = array<i32>} : memref<3x304xf32, #tpu.memory_space<vmem>>, vector<3x12xf32>,
    %25 = vector.extract_strided_slice %2 {offsets = [0, 132], sizes = [3, 12], strides = [1, 1]} : vector<3x192xf32> to vector<3x12xf32>
    %c0_14 = arith.constant 0 : index
    %c193 = arith.constant 193 : index
    %26 = vector.load %arg4[%c0_14, %c193] : memref<3x304xf32, #tpu.memory_space<vmem>>, vector<3x12xf32>
    tpu.vector_store %arg4[%c0_14, %c193], %25 {strides = array<i32>} : memref<3x304xf32, #tpu.memory_space<vmem>>, vector<3x12xf32>,
    %27 = vector.extract_strided_slice %2 {offsets = [0, 144], sizes = [3, 12], strides = [1, 1]} : vector<3x192xf32> to vector<3x12xf32>
    %c0_15 = arith.constant 0 : index
    %c209 = arith.constant 209 : index
    %28 = vector.load %arg4[%c0_15, %c209] : memref<3x304xf32, #tpu.memory_space<vmem>>, vector<3x12xf32>
    tpu.vector_store %arg4[%c0_15, %c209], %27 {strides = array<i32>} : memref<3x304xf32, #tpu.memory_space<vmem>>, vector<3x12xf32>,
    %29 = vector.extract_strided_slice %2 {offsets = [0, 156], sizes = [3, 12], strides = [1, 1]} : vector<3x192xf32> to vector<3x12xf32>
    %c0_16 = arith.constant 0 : index
    %c225 = arith.constant 225 : index
    %30 = vector.load %arg4[%c0_16, %c225] : memref<3x304xf32, #tpu.memory_space<vmem>>, vector<3x12xf32>
    tpu.vector_store %arg4[%c0_16, %c225], %29 {strides = array<i32>} : memref<3x304xf32, #tpu.memory_space<vmem>>, vector<3x12xf32>,
    %31 = vector.extract_strided_slice %2 {offsets = [0, 168], sizes = [3, 12], strides = [1, 1]} : vector<3x192xf32> to vector<3x12xf32>
    %c0_17 = arith.constant 0 : index
    %c241 = arith.constant 241 : index
    %32 = vector.load %arg4[%c0_17, %c241] : memref<3x304xf32, #tpu.memory_space<vmem>>, vector<3x12xf32>
    tpu.vector_store %arg4[%c0_17, %c241], %31 {strides = array<i32>} : memref<3x304xf32, #tpu.memory_space<vmem>>, vector<3x12xf32>,
    %33 = vector.extract_strided_slice %2 {offsets = [0, 180], sizes = [3, 12], strides = [1, 1]} : vector<3x192xf32> to vector<3x12xf32>
    %c0_18 = arith.constant 0 : index
    %c257 = arith.constant 257 : index
    %34 = vector.load %arg4[%c0_18, %c257] : memref<3x304xf32, #tpu.memory_space<vmem>>, vector<3x12xf32>
    tpu.vector_store %arg4[%c0_18, %c257], %33 {strides = array<i32>} : memref<3x304xf32, #tpu.memory_space<vmem>>, vector<3x12xf32>,
    %c0_19 = arith.constant 0 : index
    %c0_20 = arith.constant 0 : index
    %35 = vector.load %arg4[%c0_19, %c0_20] : memref<3x304xf32, #tpu.memory_space<vmem>>, vector<3x304xf32>
    %36 = vector.extract_strided_slice %35 {offsets = [0, 0], sizes = [1, 256], strides = [1, 1]} : vector<3x304xf32> to vector<1x256xf32>
    %c0_21 = arith.constant 0 : index
    %c0_22 = arith.constant 0 : index
    %37 = vector.load %arg5[%c0_21, %c0_22] : memref<27x256xf32, #tpu.memory_space<vmem>>, vector<1x256xf32>
    tpu.vector_store %arg5[%c0_21, %c0_22], %36 {strides = array<i32>} : memref<27x256xf32, #tpu.memory_space<vmem>>, vector<1x256xf32>,
    %38 = vector.extract_strided_slice %35 {offsets = [0, 1], sizes = [1, 256], strides = [1, 1]} : vector<3x304xf32> to vector<1x256xf32>
    %c1 = arith.constant 1 : index
    %c0_23 = arith.constant 0 : index
    %39 = vector.load %arg5[%c1, %c0_23] : memref<27x256xf32, #tpu.memory_space<vmem>>, vector<1x256xf32>
    tpu.vector_store %arg5[%c1, %c0_23], %38 {strides = array<i32>} : memref<27x256xf32, #tpu.memory_space<vmem>>, vector<1x256xf32>,
    %40 = vector.extract_strided_slice %35 {offsets = [0, 2], sizes = [1, 256], strides = [1, 1]} : vector<3x304xf32> to vector<1x256xf32>
    %c2 = arith.constant 2 : index
    %c0_24 = arith.constant 0 : index
    %41 = vector.load %arg5[%c2, %c0_24] : memref<27x256xf32, #tpu.memory_space<vmem>>, vector<1x256xf32>
    tpu.vector_store %arg5[%c2, %c0_24], %40 {strides = array<i32>} : memref<27x256xf32, #tpu.memory_space<vmem>>, vector<1x256xf32>,
    %42 = vector.extract_strided_slice %35 {offsets = [0, 16], sizes = [1, 256], strides = [1, 1]} : vector<3x304xf32> to vector<1x256xf32>
    %c3 = arith.constant 3 : index
    %c0_25 = arith.constant 0 : index
    %43 = vector.load %arg5[%c3, %c0_25] : memref<27x256xf32, #tpu.memory_space<vmem>>, vector<1x256xf32>
    tpu.vector_store %arg5[%c3, %c0_25], %42 {strides = array<i32>} : memref<27x256xf32, #tpu.memory_space<vmem>>, vector<1x256xf32>,
    %44 = vector.extract_strided_slice %35 {offsets = [0, 17], sizes = [1, 256], strides = [1, 1]} : vector<3x304xf32> to vector<1x256xf32>
    %c4 = arith.constant 4 : index
    %c0_26 = arith.constant 0 : index
    %45 = vector.load %arg5[%c4, %c0_26] : memref<27x256xf32, #tpu.memory_space<vmem>>, vector<1x256xf32>
    tpu.vector_store %arg5[%c4, %c0_26], %44 {strides = array<i32>} : memref<27x256xf32, #tpu.memory_space<vmem>>, vector<1x256xf32>,
    %46 = vector.extract_strided_slice %35 {offsets = [0, 18], sizes = [1, 256], strides = [1, 1]} : vector<3x304xf32> to vector<1x256xf32>
    %c5 = arith.constant 5 : index
    %c0_27 = arith.constant 0 : index
    %47 = vector.load %arg5[%c5, %c0_27] : memref<27x256xf32, #tpu.memory_space<vmem>>, vector<1x256xf32>
    tpu.vector_store %arg5[%c5, %c0_27], %46 {strides = array<i32>} : memref<27x256xf32, #tpu.memory_space<vmem>>, vector<1x256xf32>,
    %48 = vector.extract_strided_slice %35 {offsets = [0, 32], sizes = [1, 256], strides = [1, 1]} : vector<3x304xf32> to vector<1x256xf32>
    %c6 = arith.constant 6 : index
    %c0_28 = arith.constant 0 : index
    %49 = vector.load %arg5[%c6, %c0_28] : memref<27x256xf32, #tpu.memory_space<vmem>>, vector<1x256xf32>
    tpu.vector_store %arg5[%c6, %c0_28], %48 {strides = array<i32>} : memref<27x256xf32, #tpu.memory_space<vmem>>, vector<1x256xf32>,
    %50 = vector.extract_strided_slice %35 {offsets = [0, 33], sizes = [1, 256], strides = [1, 1]} : vector<3x304xf32> to vector<1x256xf32>
    %c7 = arith.constant 7 : index
    %c0_29 = arith.constant 0 : index
    %51 = vector.load %arg5[%c7, %c0_29] : memref<27x256xf32, #tpu.memory_space<vmem>>, vector<1x256xf32>
    tpu.vector_store %arg5[%c7, %c0_29], %50 {strides = array<i32>} : memref<27x256xf32, #tpu.memory_space<vmem>>, vector<1x256xf32>,
    %52 = vector.extract_strided_slice %35 {offsets = [0, 34], sizes = [1, 256], strides = [1, 1]} : vector<3x304xf32> to vector<1x256xf32>
    %c8 = arith.constant 8 : index
    %c0_30 = arith.constant 0 : index
    %53 = vector.load %arg5[%c8, %c0_30] : memref<27x256xf32, #tpu.memory_space<vmem>>, vector<1x256xf32>
    tpu.vector_store %arg5[%c8, %c0_30], %52 {strides = array<i32>} : memref<27x256xf32, #tpu.memory_space<vmem>>, vector<1x256xf32>,
    %54 = vector.extract_strided_slice %35 {offsets = [1, 0], sizes = [1, 256], strides = [1, 1]} : vector<3x304xf32> to vector<1x256xf32>
    %c9 = arith.constant 9 : index
    %c0_31 = arith.constant 0 : index
    %55 = vector.load %arg5[%c9, %c0_31] : memref<27x256xf32, #tpu.memory_space<vmem>>, vector<1x256xf32>
    tpu.vector_store %arg5[%c9, %c0_31], %54 {strides = array<i32>} : memref<27x256xf32, #tpu.memory_space<vmem>>, vector<1x256xf32>,
    %56 = vector.extract_strided_slice %35 {offsets = [1, 1], sizes = [1, 256], strides = [1, 1]} : vector<3x304xf32> to vector<1x256xf32>
    %c10 = arith.constant 10 : index
    %c0_32 = arith.constant 0 : index
    %57 = vector.load %arg5[%c10, %c0_32] : memref<27x256xf32, #tpu.memory_space<vmem>>, vector<1x256xf32>
    tpu.vector_store %arg5[%c10, %c0_32], %56 {strides = array<i32>} : memref<27x256xf32, #tpu.memory_space<vmem>>, vector<1x256xf32>,
    %58 = vector.extract_strided_slice %35 {offsets = [1, 2], sizes = [1, 256], strides = [1, 1]} : vector<3x304xf32> to vector<1x256xf32>
    %c11 = arith.constant 11 : index
    %c0_33 = arith.constant 0 : index
    %59 = vector.load %arg5[%c11, %c0_33] : memref<27x256xf32, #tpu.memory_space<vmem>>, vector<1x256xf32>
    tpu.vector_store %arg5[%c11, %c0_33], %58 {strides = array<i32>} : memref<27x256xf32, #tpu.memory_space<vmem>>, vector<1x256xf32>,
    %60 = vector.extract_strided_slice %35 {offsets = [1, 16], sizes = [1, 256], strides = [1, 1]} : vector<3x304xf32> to vector<1x256xf32>
    %c12 = arith.constant 12 : index
    %c0_34 = arith.constant 0 : index
    %61 = vector.load %arg5[%c12, %c0_34] : memref<27x256xf32, #tpu.memory_space<vmem>>, vector<1x256xf32>
    tpu.vector_store %arg5[%c12, %c0_34], %60 {strides = array<i32>} : memref<27x256xf32, #tpu.memory_space<vmem>>, vector<1x256xf32>,
    %62 = vector.extract_strided_slice %35 {offsets = [1, 17], sizes = [1, 256], strides = [1, 1]} : vector<3x304xf32> to vector<1x256xf32>
    %c13 = arith.constant 13 : index
    %c0_35 = arith.constant 0 : index
    %63 = vector.load %arg5[%c13, %c0_35] : memref<27x256xf32, #tpu.memory_space<vmem>>, vector<1x256xf32>
    tpu.vector_store %arg5[%c13, %c0_35], %62 {strides = array<i32>} : memref<27x256xf32, #tpu.memory_space<vmem>>, vector<1x256xf32>,
    %64 = vector.extract_strided_slice %35 {offsets = [1, 18], sizes = [1, 256], strides = [1, 1]} : vector<3x304xf32> to vector<1x256xf32>
    %c14 = arith.constant 14 : index
    %c0_36 = arith.constant 0 : index
    %65 = vector.load %arg5[%c14, %c0_36] : memref<27x256xf32, #tpu.memory_space<vmem>>, vector<1x256xf32>
    tpu.vector_store %arg5[%c14, %c0_36], %64 {strides = array<i32>} : memref<27x256xf32, #tpu.memory_space<vmem>>, vector<1x256xf32>,
    %66 = vector.extract_strided_slice %35 {offsets = [1, 32], sizes = [1, 256], strides = [1, 1]} : vector<3x304xf32> to vector<1x256xf32>
    %c15 = arith.constant 15 : index
    %c0_37 = arith.constant 0 : index
    %67 = vector.load %arg5[%c15, %c0_37] : memref<27x256xf32, #tpu.memory_space<vmem>>, vector<1x256xf32>
    tpu.vector_store %arg5[%c15, %c0_37], %66 {strides = array<i32>} : memref<27x256xf32, #tpu.memory_space<vmem>>, vector<1x256xf32>,
    %68 = vector.extract_strided_slice %35 {offsets = [1, 33], sizes = [1, 256], strides = [1, 1]} : vector<3x304xf32> to vector<1x256xf32>
    %c16 = arith.constant 16 : index
    %c0_38 = arith.constant 0 : index
    %69 = vector.load %arg5[%c16, %c0_38] : memref<27x256xf32, #tpu.memory_space<vmem>>, vector<1x256xf32>
    tpu.vector_store %arg5[%c16, %c0_38], %68 {strides = array<i32>} : memref<27x256xf32, #tpu.memory_space<vmem>>, vector<1x256xf32>,
    %70 = vector.extract_strided_slice %35 {offsets = [1, 34], sizes = [1, 256], strides = [1, 1]} : vector<3x304xf32> to vector<1x256xf32>
    %c17_39 = arith.constant 17 : index
    %c0_40 = arith.constant 0 : index
    %71 = vector.load %arg5[%c17_39, %c0_40] : memref<27x256xf32, #tpu.memory_space<vmem>>, vector<1x256xf32>
    tpu.vector_store %arg5[%c17_39, %c0_40], %70 {strides = array<i32>} : memref<27x256xf32, #tpu.memory_space<vmem>>, vector<1x256xf32>,
    %72 = vector.extract_strided_slice %35 {offsets = [2, 0], sizes = [1, 256], strides = [1, 1]} : vector<3x304xf32> to vector<1x256xf32>
    %c18 = arith.constant 18 : index
    %c0_41 = arith.constant 0 : index
    %73 = vector.load %arg5[%c18, %c0_41] : memref<27x256xf32, #tpu.memory_space<vmem>>, vector<1x256xf32>
    tpu.vector_store %arg5[%c18, %c0_41], %72 {strides = array<i32>} : memref<27x256xf32, #tpu.memory_space<vmem>>, vector<1x256xf32>,
    %74 = vector.extract_strided_slice %35 {offsets = [2, 1], sizes = [1, 256], strides = [1, 1]} : vector<3x304xf32> to vector<1x256xf32>
    %c19 = arith.constant 19 : index
    %c0_42 = arith.constant 0 : index
    %75 = vector.load %arg5[%c19, %c0_42] : memref<27x256xf32, #tpu.memory_space<vmem>>, vector<1x256xf32>
    tpu.vector_store %arg5[%c19, %c0_42], %74 {strides = array<i32>} : memref<27x256xf32, #tpu.memory_space<vmem>>, vector<1x256xf32>,
    %76 = vector.extract_strided_slice %35 {offsets = [2, 2], sizes = [1, 256], strides = [1, 1]} : vector<3x304xf32> to vector<1x256xf32>
    %c20 = arith.constant 20 : index
    %c0_43 = arith.constant 0 : index
    %77 = vector.load %arg5[%c20, %c0_43] : memref<27x256xf32, #tpu.memory_space<vmem>>, vector<1x256xf32>
    tpu.vector_store %arg5[%c20, %c0_43], %76 {strides = array<i32>} : memref<27x256xf32, #tpu.memory_space<vmem>>, vector<1x256xf32>,
    %78 = vector.extract_strided_slice %35 {offsets = [2, 16], sizes = [1, 256], strides = [1, 1]} : vector<3x304xf32> to vector<1x256xf32>
    %c21 = arith.constant 21 : index
    %c0_44 = arith.constant 0 : index
    %79 = vector.load %arg5[%c21, %c0_44] : memref<27x256xf32, #tpu.memory_space<vmem>>, vector<1x256xf32>
    tpu.vector_store %arg5[%c21, %c0_44], %78 {strides = array<i32>} : memref<27x256xf32, #tpu.memory_space<vmem>>, vector<1x256xf32>,
    %80 = vector.extract_strided_slice %35 {offsets = [2, 17], sizes = [1, 256], strides = [1, 1]} : vector<3x304xf32> to vector<1x256xf32>
    %c22 = arith.constant 22 : index
    %c0_45 = arith.constant 0 : index
    %81 = vector.load %arg5[%c22, %c0_45] : memref<27x256xf32, #tpu.memory_space<vmem>>, vector<1x256xf32>
    tpu.vector_store %arg5[%c22, %c0_45], %80 {strides = array<i32>} : memref<27x256xf32, #tpu.memory_space<vmem>>, vector<1x256xf32>,
    %82 = vector.extract_strided_slice %35 {offsets = [2, 18], sizes = [1, 256], strides = [1, 1]} : vector<3x304xf32> to vector<1x256xf32>
    %c23 = arith.constant 23 : index
    %c0_46 = arith.constant 0 : index
    %83 = vector.load %arg5[%c23, %c0_46] : memref<27x256xf32, #tpu.memory_space<vmem>>, vector<1x256xf32>
    tpu.vector_store %arg5[%c23, %c0_46], %82 {strides = array<i32>} : memref<27x256xf32, #tpu.memory_space<vmem>>, vector<1x256xf32>,
    %84 = vector.extract_strided_slice %35 {offsets = [2, 32], sizes = [1, 256], strides = [1, 1]} : vector<3x304xf32> to vector<1x256xf32>
    %c24 = arith.constant 24 : index
    %c0_47 = arith.constant 0 : index
    %85 = vector.load %arg5[%c24, %c0_47] : memref<27x256xf32, #tpu.memory_space<vmem>>, vector<1x256xf32>
    tpu.vector_store %arg5[%c24, %c0_47], %84 {strides = array<i32>} : memref<27x256xf32, #tpu.memory_space<vmem>>, vector<1x256xf32>,
    %86 = vector.extract_strided_slice %35 {offsets = [2, 33], sizes = [1, 256], strides = [1, 1]} : vector<3x304xf32> to vector<1x256xf32>
    %c25 = arith.constant 25 : index
    %c0_48 = arith.constant 0 : index
    %87 = vector.load %arg5[%c25, %c0_48] : memref<27x256xf32, #tpu.memory_space<vmem>>, vector<1x256xf32>
    tpu.vector_store %arg5[%c25, %c0_48], %86 {strides = array<i32>} : memref<27x256xf32, #tpu.memory_space<vmem>>, vector<1x256xf32>,
    %88 = vector.extract_strided_slice %35 {offsets = [2, 34], sizes = [1, 256], strides = [1, 1]} : vector<3x304xf32> to vector<1x256xf32>
    %c26 = arith.constant 26 : index
    %c0_49 = arith.constant 0 : index
    %89 = vector.load %arg5[%c26, %c0_49] : memref<27x256xf32, #tpu.memory_space<vmem>>, vector<1x256xf32>
    tpu.vector_store %arg5[%c26, %c0_49], %88 {strides = array<i32>} : memref<27x256xf32, #tpu.memory_space<vmem>>, vector<1x256xf32>,
    %c0_50 = arith.constant 0 : index
    %c0_51 = arith.constant 0 : index
    %90 = vector.load %arg1[%c0_50, %c0_51] : memref<11x27xf32, #tpu.memory_space<vmem>>, vector<11x27xf32>
    %c0_52 = arith.constant 0 : index
    %c0_53 = arith.constant 0 : index
    %91 = vector.load %arg5[%c0_52, %c0_53] : memref<27x256xf32, #tpu.memory_space<vmem>>, vector<27x256xf32>
    %cst_54 = arith.constant dense<0.000000e+00> : vector<11x256xf32>
    %92 = tpu.matmul %90, %91, %cst_54 {dimension_numbers = #tpu.dot_dimension_numbers<[1], [0], [0], [1], [0, 0, 1, 1], [], []>} : vector<11x27xf32>, vector<27x256xf32>, vector<11x256xf32> -> vector<11x256xf32>
    %c0_55 = arith.constant 0 : index
    %c0_56 = arith.constant 0 : index
    %93 = vector.load %arg2[%c0_55, %c0_56] : memref<11x1xf32, #tpu.memory_space<vmem>>, vector<11x1xf32>
    %94 = vector.broadcast %93 : vector<11x1xf32> to vector<11x256xf32>
    %95 = arith.addf %92, %94 : vector<11x256xf32>
    %96 = arith.mulf %95, %95 : vector<11x256xf32>
    %cst_57 = arith.constant 0.0356774069 : f32
    %97 = vector.broadcast %cst_57 : f32 to vector<11x256xf32>
    %98 = arith.mulf %97, %96 : vector<11x256xf32>
    %cst_58 = arith.constant 0.797884583 : f32
    %99 = vector.broadcast %cst_58 : f32 to vector<11x256xf32>
    %100 = arith.addf %99, %98 : vector<11x256xf32>
    %101 = arith.mulf %95, %100 : vector<11x256xf32>
    %102 = math.tanh %101 : vector<11x256xf32>
    %cst_59 = arith.constant 5.000000e-01 : f32
    %103 = vector.broadcast %cst_59 : f32 to vector<11x256xf32>
    %104 = arith.mulf %103, %95 : vector<11x256xf32>
    %cst_60 = arith.constant 1.000000e+00 : f32
    %105 = vector.broadcast %cst_60 : f32 to vector<11x256xf32>
    %106 = arith.addf %105, %102 : vector<11x256xf32>
    %107 = arith.mulf %104, %106 : vector<11x256xf32>
    %108 = vector.extract_strided_slice %107 {offsets = [0, 0], sizes = [11, 12], strides = [1, 1]} : vector<11x256xf32> to vector<11x12xf32>
    %c0_61 = arith.constant 0 : index
    %c0_62 = arith.constant 0 : index
    %109 = vector.load %arg3[%c0_61, %c0_62] : memref<11x192xf32, #tpu.memory_space<vmem>>, vector<11x12xf32>
    tpu.vector_store %arg3[%c0_61, %c0_62], %108 {strides = array<i32>} : memref<11x192xf32, #tpu.memory_space<vmem>>, vector<11x12xf32>,
    %110 = vector.extract_strided_slice %107 {offsets = [0, 16], sizes = [11, 12], strides = [1, 1]} : vector<11x256xf32> to vector<11x12xf32>
    %c0_63 = arith.constant 0 : index
    %c12_64 = arith.constant 12 : index
    %111 = vector.load %arg3[%c0_63, %c12_64] : memref<11x192xf32, #tpu.memory_space<vmem>>, vector<11x12xf32>
    tpu.vector_store %arg3[%c0_63, %c12_64], %110 {strides = array<i32>} : memref<11x192xf32, #tpu.memory_space<vmem>>, vector<11x12xf32>,
    %112 = vector.extract_strided_slice %107 {offsets = [0, 32], sizes = [11, 12], strides = [1, 1]} : vector<11x256xf32> to vector<11x12xf32>
    %c0_65 = arith.constant 0 : index
    %c24_66 = arith.constant 24 : index
    %113 = vector.load %arg3[%c0_65, %c24_66] : memref<11x192xf32, #tpu.memory_space<vmem>>, vector<11x12xf32>
    tpu.vector_store %arg3[%c0_65, %c24_66], %112 {strides = array<i32>} : memref<11x192xf32, #tpu.memory_space<vmem>>, vector<11x12xf32>,
    %114 = vector.extract_strided_slice %107 {offsets = [0, 48], sizes = [11, 12], strides = [1, 1]} : vector<11x256xf32> to vector<11x12xf32>
    %c0_67 = arith.constant 0 : index
    %c36 = arith.constant 36 : index
    %115 = vector.load %arg3[%c0_67, %c36] : memref<11x192xf32, #tpu.memory_space<vmem>>, vector<11x12xf32>
    tpu.vector_store %arg3[%c0_67, %c36], %114 {strides = array<i32>} : memref<11x192xf32, #tpu.memory_space<vmem>>, vector<11x12xf32>,
    %116 = vector.extract_strided_slice %107 {offsets = [0, 64], sizes = [11, 12], strides = [1, 1]} : vector<11x256xf32> to vector<11x12xf32>
    %c0_68 = arith.constant 0 : index
    %c48 = arith.constant 48 : index
    %117 = vector.load %arg3[%c0_68, %c48] : memref<11x192xf32, #tpu.memory_space<vmem>>, vector<11x12xf32>
    tpu.vector_store %arg3[%c0_68, %c48], %116 {strides = array<i32>} : memref<11x192xf32, #tpu.memory_space<vmem>>, vector<11x12xf32>,
    %118 = vector.extract_strided_slice %107 {offsets = [0, 80], sizes = [11, 12], strides = [1, 1]} : vector<11x256xf32> to vector<11x12xf32>
    %c0_69 = arith.constant 0 : index
    %c60 = arith.constant 60 : index
    %119 = vector.load %arg3[%c0_69, %c60] : memref<11x192xf32, #tpu.memory_space<vmem>>, vector<11x12xf32>
    tpu.vector_store %arg3[%c0_69, %c60], %118 {strides = array<i32>} : memref<11x192xf32, #tpu.memory_space<vmem>>, vector<11x12xf32>,
    %120 = vector.extract_strided_slice %107 {offsets = [0, 96], sizes = [11, 12], strides = [1, 1]} : vector<11x256xf32> to vector<11x12xf32>
    %c0_70 = arith.constant 0 : index
    %c72 = arith.constant 72 : index
    %121 = vector.load %arg3[%c0_70, %c72] : memref<11x192xf32, #tpu.memory_space<vmem>>, vector<11x12xf32>
    tpu.vector_store %arg3[%c0_70, %c72], %120 {strides = array<i32>} : memref<11x192xf32, #tpu.memory_space<vmem>>, vector<11x12xf32>,
    %122 = vector.extract_strided_slice %107 {offsets = [0, 112], sizes = [11, 12], strides = [1, 1]} : vector<11x256xf32> to vector<11x12xf32>
    %c0_71 = arith.constant 0 : index
    %c84 = arith.constant 84 : index
    %123 = vector.load %arg3[%c0_71, %c84] : memref<11x192xf32, #tpu.memory_space<vmem>>, vector<11x12xf32>
    tpu.vector_store %arg3[%c0_71, %c84], %122 {strides = array<i32>} : memref<11x192xf32, #tpu.memory_space<vmem>>, vector<11x12xf32>,
    %124 = vector.extract_strided_slice %107 {offsets = [0, 128], sizes = [11, 12], strides = [1, 1]} : vector<11x256xf32> to vector<11x12xf32>
    %c0_72 = arith.constant 0 : index
    %c96 = arith.constant 96 : index
    %125 = vector.load %arg3[%c0_72, %c96] : memref<11x192xf32, #tpu.memory_space<vmem>>, vector<11x12xf32>
    tpu.vector_store %arg3[%c0_72, %c96], %124 {strides = array<i32>} : memref<11x192xf32, #tpu.memory_space<vmem>>, vector<11x12xf32>,
    %126 = vector.extract_strided_slice %107 {offsets = [0, 144], sizes = [11, 12], strides = [1, 1]} : vector<11x256xf32> to vector<11x12xf32>
    %c0_73 = arith.constant 0 : index
    %c108 = arith.constant 108 : index
    %127 = vector.load %arg3[%c0_73, %c108] : memref<11x192xf32, #tpu.memory_space<vmem>>, vector<11x12xf32>
    tpu.vector_store %arg3[%c0_73, %c108], %126 {strides = array<i32>} : memref<11x192xf32, #tpu.memory_space<vmem>>, vector<11x12xf32>,
    %128 = vector.extract_strided_slice %107 {offsets = [0, 160], sizes = [11, 12], strides = [1, 1]} : vector<11x256xf32> to vector<11x12xf32>
    %c0_74 = arith.constant 0 : index
    %c120 = arith.constant 120 : index
    %129 = vector.load %arg3[%c0_74, %c120] : memref<11x192xf32, #tpu.memory_space<vmem>>, vector<11x12xf32>
    tpu.vector_store %arg3[%c0_74, %c120], %128 {strides = array<i32>} : memref<11x192xf32, #tpu.memory_space<vmem>>, vector<11x12xf32>,
    %130 = vector.extract_strided_slice %107 {offsets = [0, 176], sizes = [11, 12], strides = [1, 1]} : vector<11x256xf32> to vector<11x12xf32>
    %c0_75 = arith.constant 0 : index
    %c132 = arith.constant 132 : index
    %131 = vector.load %arg3[%c0_75, %c132] : memref<11x192xf32, #tpu.memory_space<vmem>>, vector<11x12xf32>
    tpu.vector_store %arg3[%c0_75, %c132], %130 {strides = array<i32>} : memref<11x192xf32, #tpu.memory_space<vmem>>, vector<11x12xf32>,
    %132 = vector.extract_strided_slice %107 {offsets = [0, 192], sizes = [11, 12], strides = [1, 1]} : vector<11x256xf32> to vector<11x12xf32>
    %c0_76 = arith.constant 0 : index
    %c144 = arith.constant 144 : index
    %133 = vector.load %arg3[%c0_76, %c144] : memref<11x192xf32, #tpu.memory_space<vmem>>, vector<11x12xf32>
    tpu.vector_store %arg3[%c0_76, %c144], %132 {strides = array<i32>} : memref<11x192xf32, #tpu.memory_space<vmem>>, vector<11x12xf32>,
    %134 = vector.extract_strided_slice %107 {offsets = [0, 208], sizes = [11, 12], strides = [1, 1]} : vector<11x256xf32> to vector<11x12xf32>
    %c0_77 = arith.constant 0 : index
    %c156 = arith.constant 156 : index
    %135 = vector.load %arg3[%c0_77, %c156] : memref<11x192xf32, #tpu.memory_space<vmem>>, vector<11x12xf32>
    tpu.vector_store %arg3[%c0_77, %c156], %134 {strides = array<i32>} : memref<11x192xf32, #tpu.memory_space<vmem>>, vector<11x12xf32>,
    %136 = vector.extract_strided_slice %107 {offsets = [0, 224], sizes = [11, 12], strides = [1, 1]} : vector<11x256xf32> to vector<11x12xf32>
    %c0_78 = arith.constant 0 : index
    %c168 = arith.constant 168 : index
    %137 = vector.load %arg3[%c0_78, %c168] : memref<11x192xf32, #tpu.memory_space<vmem>>, vector<11x12xf32>
    tpu.vector_store %arg3[%c0_78, %c168], %136 {strides = array<i32>} : memref<11x192xf32, #tpu.memory_space<vmem>>, vector<11x12xf32>,
    %138 = vector.extract_strided_slice %107 {offsets = [0, 240], sizes = [11, 12], strides = [1, 1]} : vector<11x256xf32> to vector<11x12xf32>
    %c0_79 = arith.constant 0 : index
    %c180 = arith.constant 180 : index
    %139 = vector.load %arg3[%c0_79, %c180] : memref<11x192xf32, #tpu.memory_space<vmem>>, vector<11x12xf32>
    tpu.vector_store %arg3[%c0_79, %c180], %138 {strides = array<i32>} : memref<11x192xf32, #tpu.memory_space<vmem>>, vector<11x12xf32>,
    return
  }
}

</mosaic_0001>

<llo_original>
// kernel: conv2d_gelu_pallas.1
$region0: #{conv2d_gelu_pallas.1}
  #allocation0 [shape = 'u32[]', space=smem, size = 0x4, offset = 0x4, fixed_abs, tag = 'smem constant byte address 0x4 - core index']
  #allocation1 [shape = 'u32[72,128]{1,0:T(1,128)}', space=vmem, size = 0x9000, scoped, tag = 'internal scratch']
  #allocation2 [shape = 'f32[3,304]{1,0:T(4,128)}', space=vmem, size = 0x1800, scoped, tag = 'scratch operand']
  #allocation3 [shape = 'f32[27,256]{1,0:T(8,128)}', space=vmem, size = 0x8000, scoped, tag = 'scratch operand']
  %s0 = inlined_call_operand.vmem [shape: f32[3,192], index: 0, kind: input, shape index: {}]
  %s1 = inlined_call_operand.vmem [shape: f32[11,27], index: 1, kind: input, shape index: {}]
  %s2 = inlined_call_operand.vmem [shape: f32[11,1], index: 2, kind: input, shape index: {}]
  %s3 = inlined_call_operand.vmem [shape: f32[11,192], index: 3, kind: output, shape index: {}]
  %s4 = sld [smem:[#allocation0]]
  $region22: #{conv2d_gelu_pallas.1} parent=0
    _
  %s6 = ssub.s32 1, %s4
  %s7 = scalar_select 0, %s6, %s4
  // Predicated region
  $region2: #{conv2d_gelu_pallas.1} parent=0 // pred_check
    _
  $region3: #{conv2d_gelu_pallas.1} parent=0 // pred_check_branch
    %9 = sbr.rel (0) target = $region5
  $region4: #{conv2d_gelu_pallas.1} parent=0 // pred_region
    _
  $region5: #{conv2d_gelu_pallas.1} parent=0 // pred_fallthru
    _
  // Predicated region
  $region6: #{conv2d_gelu_pallas.1} parent=0 // pred_check
    _
  $region7: #{conv2d_gelu_pallas.1} parent=0 // pred_check_branch
    %11 = sbr.rel (0) target = $region9
  $region8: #{conv2d_gelu_pallas.1} parent=0 // pred_region
    _
  $region9: #{conv2d_gelu_pallas.1} parent=0 // pred_fallthru
    _
  // Predicated region
  $region10: #{conv2d_gelu_pallas.1} parent=0 // pred_check
    _
  $region11: #{conv2d_gelu_pallas.1} parent=0 // pred_check_branch
    %13 = sbr.rel (0) target = $region13
  $region12: #{conv2d_gelu_pallas.1} parent=0 // pred_region
    _
  $region13: #{conv2d_gelu_pallas.1} parent=0 // pred_fallthru
    _
  %14 = vst [vmem:[#allocation2] sm:$0x77] 0.0
  %vm15 = vcmask 387072
  %16 = vst.msk [vmem:[#allocation2 + $0x8] sm:$0x7] %vm15, 0.0
  %v17 = vld [vmem:[%s0] sm:$0x77]
  %19 = vrot.lane.b32.xlu0 %v17, 17
  %v20 = vpop.permute.xlu0 %19
  %vm22 = vcmask 231560
  %23 = vst.msk [vmem:[#allocation2] sm:$0x7] %vm22, %v20
  %24 = vrot.lane.b32.xlu0 %v17, 21
  %v25 = vpop.permute.xlu0 %24
  %vm27 = vcmask 362760
  %28 = vst.msk [vmem:[#allocation2] sm:$0x7] %vm27, %v25
  %29 = vrot.lane.b32.xlu0 %v17, 25
  %v30 = vpop.permute.xlu0 %29
  %vm32 = vcmask 493960
  %33 = vst.msk [vmem:[#allocation2] sm:$0x7] %vm32, %v30
  %34 = vrot.lane.b32.xlu0 %v17, 29
  %v35 = vpop.permute.xlu0 %34
  %vm37 = vcmask 625160
  %38 = vst.msk [vmem:[#allocation2] sm:$0x7] %vm37, %v35
  %39 = vrot.lane.b32.xlu0 %v17, 33
  %v40 = vpop.permute.xlu0 %39
  %vm42 = vcmask 756360
  %43 = vst.msk [vmem:[#allocation2] sm:$0x7] %vm42, %v40
  %44 = vrot.lane.b32.xlu0 %v17, 37
  %v45 = vpop.permute.xlu0 %44
  %vm47 = vcmask 887560
  %48 = vst.msk [vmem:[#allocation2] sm:$0x7] %vm47, %v45
  %49 = vrot.lane.b32.xlu0 %v17, 41
  %v50 = vpop.permute.xlu0 %49
  %vm52 = vcmask 1018760
  %53 = vst.msk [vmem:[#allocation2] sm:$0x7] %vm52, %v50
  %54 = vrot.lane.b32.xlu0 %v17, 45
  %v55 = vpop.permute.xlu0 %54
  %vm57 = vcmask 100360
  %58 = vst.msk [vmem:[#allocation2 + $0x4] sm:$0x7] %vm57, %v55
  %59 = vrot.lane.b32.xlu0 %v17, 49
  %v60 = vpop.permute.xlu0 %59
  %62 = vst.msk [vmem:[#allocation2 + $0x4] sm:$0x7] %vm22, %v60
  %63 = vrot.lane.b32.xlu0 %v17, 53
  %v64 = vpop.permute.xlu0 %63
  %66 = vst.msk [vmem:[#allocation2 + $0x4] sm:$0x7] %vm27, %v64
  %67 = vrot.lane.b32.xlu0 %v17, 57
  %v68 = vpop.permute.xlu0 %67
  %v69 = vrot.slane %v68, 4
  %vm70 = vcmask 465920
  %v71 = vsel %vm70, %v68, %v69
  %73 = vst.msk [vmem:[#allocation2 + $0x4] sm:$0x7] %vm32, %v71
  %74 = vrot.lane.b32.xlu0 %v17, 61
  %v75 = vpop.permute.xlu0 %74
  %v76 = vrot.slane %v75, 4
  %vm77 = vcmask 498688
  %v78 = vsel %vm77, %v75, %v76
  %80 = vst.msk [vmem:[#allocation2 + $0x4] sm:$0x7] %vm37, %v78
  %81 = vrot.lane.b32.xlu0 %v17, 65
  %v82 = vpop.permute.xlu0 %81
  %v83 = vrot.slane %v82, 4
  %vm84 = vcmask 531456
  %v85 = vsel %vm84, %v82, %v83
  %87 = vst.msk [vmem:[#allocation2 + $0x4] sm:$0x7] %vm42, %v85
  %88 = vrot.lane.b32.xlu0 %v17, 69
  %v89 = vpop.permute.xlu0 %88
  %v90 = vrot.slane %v89, 4
  %vm91 = vcmask 564224
  %v92 = vsel %vm91, %v89, %v90
  %94 = vst.msk [vmem:[#allocation2 + $0x4] sm:$0x7] %vm47, %v92
  %95 = vrot.lane.b32.xlu0 %v17, 73
  %v96 = vpop.permute.xlu0 %95
  %v97 = vrot.slane %v96, 4
  %vm98 = vcmask 596992
  %v99 = vsel %vm98, %v96, %v97
  %101 = vst.msk [vmem:[#allocation2 + $0x4] sm:$0x7] %vm52, %v99
  %102 = vrot.lane.b32.xlu0 %v17, 77
  %v103 = vpop.permute.xlu0 %102
  %v104 = vrot.slane %v103, 4
  %106 = vst.msk [vmem:[#allocation2 + $0x8] sm:$0x7] %vm57, %v104
  %v107 = vld [vmem:[#allocation2] sm:$0x77]
  %v108 = vld [vmem:[#allocation2 + $0x8] sm:$0x7]
  %v110 = vrot.slane %v107, 3
  %vm111 = vcmask 1040384
  %v112 = vsel %vm111, %v107, %v110
  %v114 = vlaneseq
  %vm115 = vcmp.ge.s32.totalorder %v114, 0
  %vm116 = vcmp.lt.s32.totalorder %v114, 256
  %vm117 = vmand %vm115, %vm116
  %118 = vst.msk [vmem:[#allocation3] ss:$8 sm:$0x3] %vm117, %v112
  %119 = vst.msk [vmem:[#allocation3] ss:$8 sm:$0x0] %vm117, %v112
  %v121 = vrot.slane %v108, 6
  %v122 = vrot.slane %v108, 1
  %vm123 = vcmask 1042434
  %v124 = vsel %vm123, %v121, %v122
  %vm125 = vcmask 1041408
  %v126 = vsel %vm125, %v112, %v124
  %127 = vrot.lane.b32.xlu0 %v126, 127
  %v128 = vpop.permute.xlu0 %127
  %v129 = vrot.slane %v128, 1
  %vm130 = vcmask 1039360
  %v131 = vsel %vm130, %v128, %v129
  %s133 = scalar_lea.vmem [#allocation3], 1
  %134 = vst.msk [vmem:[%s133] ss:$8 sm:$0x3] %vm117, %v131
  %135 = vst.msk [vmem:[%s133] ss:$8 sm:$0x0] %vm117, %v131
  %136 = vrot.lane.b32.xlu0 %v126, 126
  %v137 = vpop.permute.xlu0 %136
  %v138 = vrot.slane %v137, 1
  %vm139 = vcmask 1031168
  %v140 = vsel %vm139, %v137, %v138
  %s142 = scalar_lea.vmem [#allocation3], 2
  %143 = vst.msk [vmem:[%s142] ss:$8 sm:$0x3] %vm117, %v140
  %144 = vst.msk [vmem:[%s142] ss:$8 sm:$0x0] %vm117, %v140
  %145 = vrot.lane.b32.xlu0 %v126, 112
  %v146 = vpop.permute.xlu0 %145
  %v147 = vrot.slane %v146, 1
  %vm148 = vcmask 916480
  %v149 = vsel %vm148, %v146, %v147
  %s151 = scalar_lea.vmem [#allocation3], 3
  %152 = vst.msk [vmem:[%s151] ss:$8 sm:$0x3] %vm117, %v149
  %153 = vst.msk [vmem:[%s151] ss:$8 sm:$0x0] %vm117, %v149
  %154 = vrot.lane.b32.xlu0 %v126, 111
  %v155 = vpop.permute.xlu0 %154
  %v156 = vrot.slane %v155, 1
  %vm157 = vcmask 908288
  %v158 = vsel %vm157, %v155, %v156
  %s160 = scalar_lea.vmem [#allocation3], 4
  %161 = vst.msk [vmem:[%s160] ss:$8 sm:$0x3] %vm117, %v158
  %162 = vst.msk [vmem:[%s160] ss:$8 sm:$0x0] %vm117, %v158
  %163 = vrot.lane.b32.xlu0 %v126, 110
  %v164 = vpop.permute.xlu0 %163
  %v165 = vrot.slane %v164, 1
  %vm166 = vcmask 900096
  %v167 = vsel %vm166, %v164, %v165
  %s169 = scalar_lea.vmem [#allocation3], 5
  %170 = vst.msk [vmem:[%s169] ss:$8 sm:$0x3] %vm117, %v167
  %171 = vst.msk [vmem:[%s169] ss:$8 sm:$0x0] %vm117, %v167
  %172 = vrot.lane.b32.xlu0 %v126, 96
  %v173 = vpop.permute.xlu0 %172
  %v174 = vrot.slane %v173, 1
  %vm175 = vcmask 785408
  %v176 = vsel %vm175, %v173, %v174
  %s178 = scalar_lea.vmem [#allocation3], 6
  %179 = vst.msk [vmem:[%s178] ss:$8 sm:$0x3] %vm117, %v176
  %180 = vst.msk [vmem:[%s178] ss:$8 sm:$0x0] %vm117, %v176
  %181 = vrot.lane.b32.xlu0 %v126, 95
  %v182 = vpop.permute.xlu0 %181
  %v183 = vrot.slane %v182, 1
  %vm184 = vcmask 777216
  %v185 = vsel %vm184, %v182, %v183
  %s187 = scalar_lea.vmem [#allocation3], 7
  %188 = vst.msk [vmem:[%s187] ss:$8 sm:$0x3] %vm117, %v185
  %189 = vst.msk [vmem:[%s187] ss:$8 sm:$0x0] %vm117, %v185
  %190 = vrot.lane.b32.xlu0 %v126, 94
  %v191 = vpop.permute.xlu0 %190
  %v192 = vrot.slane %v191, 1
  %vm193 = vcmask 769024
  %v194 = vsel %vm193, %v191, %v192
  %s196 = scalar_lea.vmem [#allocation3], 16
  %197 = vst.msk [vmem:[%s196] ss:$8 sm:$0x3] %vm117, %v194
  %198 = vst.msk [vmem:[%s196] ss:$8 sm:$0x0] %vm117, %v194
  %199 = vst [vmem:[#allocation1] sm:$0xff] %v107
  %s200 = scalar_lea.vmem [#allocation1], 1
  %v201 = vld [vmem:[%s200] ss:$4 sm:$0xff]
  %s203 = scalar_lea.vmem [#allocation3], 17
  %204 = vst.msk [vmem:[%s203] ss:$8 sm:$0x3] %vm117, %v201
  %205 = vst.msk [vmem:[%s203] ss:$8 sm:$0x0] %vm117, %v201
  %206 = vst [vmem:[#allocation1] sm:$0xff] %v107
  %207 = vst [vmem:[#allocation1 + $0x8] sm:$0xff] %v108
  %s208 = scalar_lea.vmem [#allocation1], 1
  %v209 = vld [vmem:[%s208] ss:$4 sm:$0xff]
  %210 = vrot.lane.b32.xlu0 %v209, 127
  %v211 = vpop.permute.xlu0 %210
  %v212 = vrot.slane %v211, 1
  %v213 = vsel %vm130, %v211, %v212
  %s215 = scalar_lea.vmem [#allocation3], 18
  %216 = vst.msk [vmem:[%s215] ss:$8 sm:$0x3] %vm117, %v213
  %217 = vst.msk [vmem:[%s215] ss:$8 sm:$0x0] %vm117, %v213
  %218 = vst [vmem:[#allocation1] sm:$0xff] %v107
  %219 = vst [vmem:[#allocation1 + $0x8] sm:$0xff] %v108
  %s220 = scalar_lea.vmem [#allocation1], 1
  %v221 = vld [vmem:[%s220] ss:$4 sm:$0xff]
  %222 = vrot.lane.b32.xlu0 %v221, 126
  %v223 = vpop.permute.xlu0 %222
  %v224 = vrot.slane %v223, 1
  %v225 = vsel %vm139, %v223, %v224
  %s227 = scalar_lea.vmem [#allocation3], 19
  %228 = vst.msk [vmem:[%s227] ss:$8 sm:$0x3] %vm117, %v225
  %229 = vst.msk [vmem:[%s227] ss:$8 sm:$0x0] %vm117, %v225
  %230 = vst [vmem:[#allocation1] sm:$0xff] %v107
  %231 = vst [vmem:[#allocation1 + $0x8] sm:$0xff] %v108
  %s232 = scalar_lea.vmem [#allocation1], 1
  %v233 = vld [vmem:[%s232] ss:$4 sm:$0xff]
  %234 = vrot.lane.b32.xlu0 %v233, 112
  %v235 = vpop.permute.xlu0 %234
  %v236 = vrot.slane %v235, 1
  %v237 = vsel %vm148, %v235, %v236
  %s239 = scalar_lea.vmem [#allocation3], 20
  %240 = vst.msk [vmem:[%s239] ss:$8 sm:$0x3] %vm117, %v237
  %241 = vst.msk [vmem:[%s239] ss:$8 sm:$0x0] %vm117, %v237
  %242 = vst [vmem:[#allocation1] sm:$0xff] %v107
  %243 = vst [vmem:[#allocation1 + $0x8] sm:$0xff] %v108
  %s244 = scalar_lea.vmem [#allocation1], 1
  %v245 = vld [vmem:[%s244] ss:$4 sm:$0xff]
  %246 = vrot.lane.b32.xlu0 %v245, 111
  %v247 = vpop.permute.xlu0 %246
  %v248 = vrot.slane %v247, 1
  %v249 = vsel %vm157, %v247, %v248
  %s251 = scalar_lea.vmem [#allocation3], 21
  %252 = vst.msk [vmem:[%s251] ss:$8 sm:$0x3] %vm117, %v249
  %253 = vst.msk [vmem:[%s251] ss:$8 sm:$0x0] %vm117, %v249
  %254 = vst [vmem:[#allocation1] sm:$0xff] %v107
  %255 = vst [vmem:[#allocation1 + $0x8] sm:$0xff] %v108
  %s256 = scalar_lea.vmem [#allocation1], 1
  %v257 = vld [vmem:[%s256] ss:$4 sm:$0xff]
  %258 = vrot.lane.b32.xlu0 %v257, 110
  %v259 = vpop.permute.xlu0 %258
  %v260 = vrot.slane %v259, 1
  %v261 = vsel %vm166, %v259, %v260
  %s263 = scalar_lea.vmem [#allocation3], 22
  %264 = vst.msk [vmem:[%s263] ss:$8 sm:$0x3] %vm117, %v261
  %265 = vst.msk [vmem:[%s263] ss:$8 sm:$0x0] %vm117, %v261
  %266 = vst [vmem:[#allocation1] sm:$0xff] %v107
  %267 = vst [vmem:[#allocation1 + $0x8] sm:$0xff] %v108
  %s268 = scalar_lea.vmem [#allocation1], 1
  %v269 = vld [vmem:[%s268] ss:$4 sm:$0xff]
  %270 = vrot.lane.b32.xlu0 %v269, 96
  %v271 = vpop.permute.xlu0 %270
  %v272 = vrot.slane %v271, 1
  %v273 = vsel %vm175, %v271, %v272
  %s275 = scalar_lea.vmem [#allocation3], 23
  %276 = vst.msk [vmem:[%s275] ss:$8 sm:$0x3] %vm117, %v273
  %277 = vst.msk [vmem:[%s275] ss:$8 sm:$0x0] %vm117, %v273
  %278 = vst [vmem:[#allocation1] sm:$0xff] %v107
  %279 = vst [vmem:[#allocation1 + $0x8] sm:$0xff] %v108
  %s280 = scalar_lea.vmem [#allocation1], 1
  %v281 = vld [vmem:[%s280] ss:$4 sm:$0xff]
  %282 = vrot.lane.b32.xlu0 %v281, 95
  %v283 = vpop.permute.xlu0 %282
  %v284 = vrot.slane %v283, 1
  %v285 = vsel %vm184, %v283, %v284
  %s287 = scalar_lea.vmem [#allocation3], 32
  %288 = vst.msk [vmem:[%s287] ss:$8 sm:$0x3] %vm117, %v285
  %289 = vst.msk [vmem:[%s287] ss:$8 sm:$0x0] %vm117, %v285
  %290 = vst [vmem:[#allocation1] sm:$0xff] %v107
  %291 = vst [vmem:[#allocation1 + $0x8] sm:$0xff] %v108
  %s292 = scalar_lea.vmem [#allocation1], 1
  %v293 = vld [vmem:[%s292] ss:$4 sm:$0xff]
  %294 = vrot.lane.b32.xlu0 %v293, 94
  %v295 = vpop.permute.xlu0 %294
  %v296 = vrot.slane %v295, 1
  %v297 = vsel %vm193, %v295, %v296
  %s299 = scalar_lea.vmem [#allocation3], 33
  %300 = vst.msk [vmem:[%s299] ss:$8 sm:$0x3] %vm117, %v297
  %301 = vst.msk [vmem:[%s299] ss:$8 sm:$0x0] %vm117, %v297
  %302 = vst [vmem:[#allocation1] sm:$0xff] %v107
  %s303 = scalar_lea.vmem [#allocation1], 2
  %v304 = vld [vmem:[%s303] ss:$4 sm:$0xff]
  %s306 = scalar_lea.vmem [#allocation3], 34
  %307 = vst.msk [vmem:[%s306] ss:$8 sm:$0x3] %vm117, %v304
  %308 = vst.msk [vmem:[%s306] ss:$8 sm:$0x0] %vm117, %v304
  %309 = vst [vmem:[#allocation1] sm:$0xff] %v107
  %310 = vst [vmem:[#allocation1 + $0x8] sm:$0xff] %v108
  %s311 = scalar_lea.vmem [#allocation1], 2
  %v312 = vld [vmem:[%s311] ss:$4 sm:$0xff]
  %313 = vrot.lane.b32.xlu0 %v312, 127
  %v314 = vpop.permute.xlu0 %313
  %v315 = vrot.slane %v314, 1
  %v316 = vsel %vm130, %v314, %v315
  %s318 = scalar_lea.vmem [#allocation3], 35
  %319 = vst.msk [vmem:[%s318] ss:$8 sm:$0x3] %vm117, %v316
  %320 = vst.msk [vmem:[%s318] ss:$8 sm:$0x0] %vm117, %v316
  %321 = vst [vmem:[#allocation1] sm:$0xff] %v107
  %322 = vst [vmem:[#allocation1 + $0x8] sm:$0xff] %v108
  %s323 = scalar_lea.vmem [#allocation1], 2
  %v324 = vld [vmem:[%s323] ss:$4 sm:$0xff]
  %325 = vrot.lane.b32.xlu0 %v324, 126
  %v326 = vpop.permute.xlu0 %325
  %v327 = vrot.slane %v326, 1
  %v328 = vsel %vm139, %v326, %v327
  %s330 = scalar_lea.vmem [#allocation3], 36
  %331 = vst.msk [vmem:[%s330] ss:$8 sm:$0x3] %vm117, %v328
  %332 = vst.msk [vmem:[%s330] ss:$8 sm:$0x0] %vm117, %v328
  %333 = vst [vmem:[#allocation1] sm:$0xff] %v107
  %334 = vst [vmem:[#allocation1 + $0x8] sm:$0xff] %v108
  %s335 = scalar_lea.vmem [#allocation1], 2
  %v336 = vld [vmem:[%s335] ss:$4 sm:$0xff]
  %337 = vrot.lane.b32.xlu0 %v336, 112
  %v338 = vpop.permute.xlu0 %337
  %v339 = vrot.slane %v338, 1
  %v340 = vsel %vm148, %v338, %v339
  %s342 = scalar_lea.vmem [#allocation3], 37
  %343 = vst.msk [vmem:[%s342] ss:$8 sm:$0x3] %vm117, %v340
  %344 = vst.msk [vmem:[%s342] ss:$8 sm:$0x0] %vm117, %v340
  %345 = vst [vmem:[#allocation1] sm:$0xff] %v107
  %346 = vst [vmem:[#allocation1 + $0x8] sm:$0xff] %v108
  %s347 = scalar_lea.vmem [#allocation1], 2
  %v348 = vld [vmem:[%s347] ss:$4 sm:$0xff]
  %349 = vrot.lane.b32.xlu0 %v348, 111
  %v350 = vpop.permute.xlu0 %349
  %v351 = vrot.slane %v350, 1
  %v352 = vsel %vm157, %v350, %v351
  %s354 = scalar_lea.vmem [#allocation3], 38
  %355 = vst.msk [vmem:[%s354] ss:$8 sm:$0x3] %vm117, %v352
  %356 = vst.msk [vmem:[%s354] ss:$8 sm:$0x0] %vm117, %v352
  %357 = vst [vmem:[#allocation1] sm:$0xff] %v107
  %358 = vst [vmem:[#allocation1 + $0x8] sm:$0xff] %v108
  %s359 = scalar_lea.vmem [#allocation1], 2
  %v360 = vld [vmem:[%s359] ss:$4 sm:$0xff]
  %361 = vrot.lane.b32.xlu0 %v360, 110
  %v362 = vpop.permute.xlu0 %361
  %v363 = vrot.slane %v362, 1
  %v364 = vsel %vm166, %v362, %v363
  %s366 = scalar_lea.vmem [#allocation3], 39
  %367 = vst.msk [vmem:[%s366] ss:$8 sm:$0x3] %vm117, %v364
  %368 = vst.msk [vmem:[%s366] ss:$8 sm:$0x0] %vm117, %v364
  %369 = vst [vmem:[#allocation1] sm:$0xff] %v107
  %370 = vst [vmem:[#allocation1 + $0x8] sm:$0xff] %v108
  %s371 = scalar_lea.vmem [#allocation1], 2
  %v372 = vld [vmem:[%s371] ss:$4 sm:$0xff]
  %373 = vrot.lane.b32.xlu0 %v372, 96
  %v374 = vpop.permute.xlu0 %373
  %v375 = vrot.slane %v374, 1
  %v376 = vsel %vm175, %v374, %v375
  %s378 = scalar_lea.vmem [#allocation3], 48
  %379 = vst.msk [vmem:[%s378] ss:$8 sm:$0x3] %vm117, %v376
  %380 = vst.msk [vmem:[%s378] ss:$8 sm:$0x0] %vm117, %v376
  %381 = vst [vmem:[#allocation1] sm:$0xff] %v107
  %382 = vst [vmem:[#allocation1 + $0x8] sm:$0xff] %v108
  %s383 = scalar_lea.vmem [#allocation1], 2
  %v384 = vld [vmem:[%s383] ss:$4 sm:$0xff]
  %385 = vrot.lane.b32.xlu0 %v384, 95
  %v386 = vpop.permute.xlu0 %385
  %v387 = vrot.slane %v386, 1
  %v388 = vsel %vm184, %v386, %v387
  %s390 = scalar_lea.vmem [#allocation3], 49
  %391 = vst.msk [vmem:[%s390] ss:$8 sm:$0x3] %vm117, %v388
  %392 = vst.msk [vmem:[%s390] ss:$8 sm:$0x0] %vm117, %v388
  %393 = vst [vmem:[#allocation1] sm:$0xff] %v107
  %394 = vst [vmem:[#allocation1 + $0x8] sm:$0xff] %v108
  %s395 = scalar_lea.vmem [#allocation1], 2
  %v396 = vld [vmem:[%s395] ss:$4 sm:$0xff]
  %397 = vrot.lane.b32.xlu0 %v396, 94
  %v398 = vpop.permute.xlu0 %397
  %v399 = vrot.slane %v398, 1
  %v400 = vsel %vm193, %v398, %v399
  %s402 = scalar_lea.vmem [#allocation3], 50
  %403 = vst.msk [vmem:[%s402] ss:$8 sm:$0x3] %vm117, %v400
  %404 = vst.msk [vmem:[%s402] ss:$8 sm:$0x0] %vm117, %v400
  %v405 = vld [vmem:[%s1] sm:$0xff]
  %v406 = vld [vmem:[%s1 + $0x8] sm:$0x7]
  %v407 = vld [vmem:[#allocation3] sm:$0xff]
  %v408 = vld [vmem:[#allocation3 + $0x8] sm:$0xff]
  %v409 = vld [vmem:[#allocation3 + $0x10] sm:$0xff]
  %v410 = vld [vmem:[#allocation3 + $0x18] sm:$0xff]
  %v411 = vld [vmem:[#allocation3 + $0x20] sm:$0xff]
  %v412 = vld [vmem:[#allocation3 + $0x28] sm:$0xff]
  %v413 = vld [vmem:[#allocation3 + $0x30] sm:$0x7]
  %v414 = vld [vmem:[#allocation3 + $0x38] sm:$0x7]
  %v415 = vld [vmem:[%s2] sm:$0xff]
  %v416 = vld [vmem:[%s2 + $0x8] sm:$0x7]
  %418 = vset.pattern.permute.xlu0 0
  %419 = vperm.xlu0 %418, %v415
  %v420 = vpop.permute.xlu0 %419
  %423 = vset.pattern.permute.xlu0 0
  %424 = vperm.xlu0 %423, %v416
  %v425 = vpop.permute.xlu0 %424
  %vm427 = vcmask 220160
  %v429 = vsel %vm427, %v405, 0
  %v432 = vsel %vm427, %v406, 0
  %vm434 = vcmask 1042432
  %v436 = vsel %vm434, %v413, 0
  %v439 = vsel %vm434, %v414, 0
  %441 = vmatpush.msra.mxu0 0.0
  %442 = vmatpush.msra.mxu0 0.0
  %443 = vmatpush.msra.mxu0 0.0
  %444 = vmatpush.msra.mxu0 0.0
  %445 = vmatpush.msra.mxu0 0.0
  %446 = vmatpush.msra.mxu0 0.0
  %447 = vmatpush.msra.mxu0 0.0
  %448 = vmatpush.msra.mxu0 0.0
  %449 = vmatpush.msra.mxu0 0.0
  %450 = vmatpush.msra.mxu0 0.0
  %451 = vmatpush.msra.mxu0 0.0
  %452 = vmatpush.msra.mxu0 0.0
  %453 = vmatpush.msra.mxu0 %v436
  %454 = vmatpush.msra.mxu0 %v411
  %455 = vmatpush.msra.mxu0 %v409
  %456 = vmatpush.msra.mxu0 %v407
  %457 = vmatmul.f32.gmra.mxu0 %v429
  %v458 = vpop.f32.mrf.mxu0
  %v459 = vadd.f32 %v420, %v458
  %460 = vmatmul.f32.gmra.mxu0 %v432
  %v461 = vpop.f32.mrf.mxu0
  %v462 = vadd.f32 %v425, %v461
  %463 = vdwg.mxu0
  %464 = vmatpush.msra.mxu0 0.0
  %465 = vmatpush.msra.mxu0 0.0
  %466 = vmatpush.msra.mxu0 0.0
  %467 = vmatpush.msra.mxu0 0.0
  %468 = vmatpush.msra.mxu0 0.0
  %469 = vmatpush.msra.mxu0 0.0
  %470 = vmatpush.msra.mxu0 0.0
  %471 = vmatpush.msra.mxu0 0.0
  %472 = vmatpush.msra.mxu0 0.0
  %473 = vmatpush.msra.mxu0 0.0
  %474 = vmatpush.msra.mxu0 0.0
  %475 = vmatpush.msra.mxu0 0.0
  %476 = vmatpush.msra.mxu0 %v439
  %477 = vmatpush.msra.mxu0 %v412
  %478 = vmatpush.msra.mxu0 %v410
  %479 = vmatpush.msra.mxu0 %v408
  %480 = vmatmul.f32.gmra.mxu0 %v429
  %v481 = vpop.f32.mrf.mxu0
  %v482 = vadd.f32 %v420, %v481
  %483 = vmatmul.f32.gmra.mxu0 %v432
  %v484 = vpop.f32.mrf.mxu0
  %v485 = vadd.f32 %v425, %v484
  %486 = vdwg.mxu0
  %v487 = vmul.f32 %v459, %v459
  %v488 = vmul.f32 %v482, %v482
  %v489 = vmul.f32 %v462, %v462
  %v490 = vmul.f32 %v485, %v485
  %v491 = vmul.f32 %v487, 0.035677407
  %v492 = vmul.f32 %v488, 0.035677407
  %v493 = vmul.f32 %v489, 0.035677407
  %v494 = vmul.f32 %v490, 0.035677407
  %v495 = vadd.f32 %v491, 0.7978846
  %v496 = vadd.f32 %v492, 0.7978846
  %v497 = vadd.f32 %v493, 0.7978846
  %v498 = vadd.f32 %v494, 0.7978846
  %v499 = vmul.f32 %v459, %v495
  %v500 = vmul.f32 %v482, %v496
  %v501 = vmul.f32 %v462, %v497
  %v502 = vmul.f32 %v485, %v498
  %v503 = vtanh.pop %v499
  %v504 = vtanh.pop %v500
  %v505 = vtanh.pop %v501
  %v506 = vtanh.pop %v502
  %v507 = vmul.f32 %v459, 0.5
  %v508 = vmul.f32 %v482, 0.5
  %v509 = vmul.f32 %v462, 0.5
  %v510 = vmul.f32 %v485, 0.5
  %v511 = vadd.f32 %v503, 1.0
  %v512 = vadd.f32 %v504, 1.0
  %v513 = vadd.f32 %v505, 1.0
  %v514 = vadd.f32 %v506, 1.0
  %v515 = vmul.f32 %v507, %v511
  %v516 = vmul.f32 %v508, %v512
  %v517 = vmul.f32 %v509, %v513
  %v518 = vmul.f32 %v510, %v514
  %vm519 = vcmask 97280
  %520 = vst.msk [vmem:[%s3] sm:$0xff] %vm519, %v515
  %vm521 = vcmask 92160
  %522 = vst.msk [vmem:[%s3 + $0x10] sm:$0x7] %vm521, %v517
  %525 = vrot.lane.b32.xlu0 %v515, 124
  %v526 = vpop.permute.xlu0 %525
  %527 = vrot.lane.b32.xlu0 %v517, 124
  %v528 = vpop.permute.xlu0 %527
  %vm531 = vcmask 195680
  %532 = vst.msk [vmem:[%s3] sm:$0xff] %vm531, %v526
  %vm533 = vcmask 190560
  %534 = vst.msk [vmem:[%s3 + $0x10] sm:$0x7] %vm533, %v528
  %535 = vrot.lane.b32.xlu0 %v515, 120
  %v536 = vpop.permute.xlu0 %535
  %537 = vrot.lane.b32.xlu0 %v517, 120
  %v538 = vpop.permute.xlu0 %537
  %vm541 = vcmask 294080
  %542 = vst.msk [vmem:[%s3] sm:$0xff] %vm541, %v536
  %vm543 = vcmask 288960
  %544 = vst.msk [vmem:[%s3 + $0x10] sm:$0x7] %vm543, %v538
  %545 = vrot.lane.b32.xlu0 %v515, 116
  %v546 = vpop.permute.xlu0 %545
  %547 = vrot.lane.b32.xlu0 %v517, 116
  %v548 = vpop.permute.xlu0 %547
  %vm551 = vcmask 392480
  %552 = vst.msk [vmem:[%s3] sm:$0xff] %vm551, %v546
  %vm553 = vcmask 387360
  %554 = vst.msk [vmem:[%s3 + $0x10] sm:$0x7] %vm553, %v548
  %555 = vrot.lane.b32.xlu0 %v515, 112
  %v556 = vpop.permute.xlu0 %555
  %557 = vrot.lane.b32.xlu0 %v517, 112
  %v558 = vpop.permute.xlu0 %557
  %vm561 = vcmask 490880
  %562 = vst.msk [vmem:[%s3] sm:$0xff] %vm561, %v556
  %vm563 = vcmask 485760
  %564 = vst.msk [vmem:[%s3 + $0x10] sm:$0x7] %vm563, %v558
  %565 = vrot.lane.b32.xlu0 %v515, 108
  %v566 = vpop.permute.xlu0 %565
  %567 = vrot.lane.b32.xlu0 %v517, 108
  %v568 = vpop.permute.xlu0 %567
  %vm571 = vcmask 589280
  %572 = vst.msk [vmem:[%s3] sm:$0xff] %vm571, %v566
  %vm573 = vcmask 584160
  %574 = vst.msk [vmem:[%s3 + $0x10] sm:$0x7] %vm573, %v568
  %575 = vrot.lane.b32.xlu0 %v515, 104
  %v576 = vpop.permute.xlu0 %575
  %577 = vrot.lane.b32.xlu0 %v517, 104
  %v578 = vpop.permute.xlu0 %577
  %vm581 = vcmask 687680
  %582 = vst.msk [vmem:[%s3] sm:$0xff] %vm581, %v576
  %vm583 = vcmask 682560
  %584 = vst.msk [vmem:[%s3 + $0x10] sm:$0x7] %vm583, %v578
  %585 = vrot.lane.b32.xlu0 %v515, 100
  %v586 = vpop.permute.xlu0 %585
  %587 = vrot.lane.b32.xlu0 %v517, 100
  %v588 = vpop.permute.xlu0 %587
  %vm591 = vcmask 786080
  %592 = vst.msk [vmem:[%s3] sm:$0xff] %vm591, %v586
  %vm593 = vcmask 780960
  %594 = vst.msk [vmem:[%s3 + $0x10] sm:$0x7] %vm593, %v588
  %597 = vrot.lane.b32.xlu0 %v516, 96
  %v598 = vpop.permute.xlu0 %597
  %599 = vrot.lane.b32.xlu0 %v518, 96
  %v600 = vpop.permute.xlu0 %599
  %vm603 = vcmask 884480
  %604 = vst.msk [vmem:[%s3] sm:$0xff] %vm603, %v598
  %vm605 = vcmask 879360
  %606 = vst.msk [vmem:[%s3 + $0x10] sm:$0x7] %vm605, %v600
  %607 = vrot.lane.b32.xlu0 %v516, 92
  %v608 = vpop.permute.xlu0 %607
  %609 = vrot.lane.b32.xlu0 %v518, 92
  %v610 = vpop.permute.xlu0 %609
  %vm613 = vcmask 982880
  %614 = vst.msk [vmem:[%s3] sm:$0xff] %vm613, %v608
  %vm615 = vcmask 977760
  %616 = vst.msk [vmem:[%s3 + $0x10] sm:$0x7] %vm615, %v610
  %617 = vrot.lane.b32.xlu0 %v516, 88
  %v618 = vpop.permute.xlu0 %617
  %619 = vrot.lane.b32.xlu0 %v518, 88
  %v620 = vpop.permute.xlu0 %619
  %vm623 = vcmask 1048512
  %624 = vst.msk [vmem:[%s3] sm:$0xff] %vm623, %v618
  %vm625 = vcmask 31744
  %626 = vst.msk [vmem:[%s3 + $0x8] sm:$0xff] %vm625, %v618
  %vm627 = vcmask 1043392
  %628 = vst.msk [vmem:[%s3 + $0x10] sm:$0x7] %vm627, %v620
  %vm629 = vcmask 26624
  %630 = vst.msk [vmem:[%s3 + $0x18] sm:$0x7] %vm629, %v620
  %631 = vrot.lane.b32.xlu0 %v516, 84
  %v632 = vpop.permute.xlu0 %631
  %633 = vrot.lane.b32.xlu0 %v518, 84
  %v634 = vpop.permute.xlu0 %633
  %vm637 = vcmask 130080
  %638 = vst.msk [vmem:[%s3 + $0x8] sm:$0xff] %vm637, %v632
  %vm639 = vcmask 124960
  %640 = vst.msk [vmem:[%s3 + $0x18] sm:$0x7] %vm639, %v634
  %641 = vrot.lane.b32.xlu0 %v516, 80
  %v642 = vpop.permute.xlu0 %641
  %643 = vrot.lane.b32.xlu0 %v518, 80
  %v644 = vpop.permute.xlu0 %643
  %vm647 = vcmask 228480
  %648 = vst.msk [vmem:[%s3 + $0x8] sm:$0xff] %vm647, %v642
  %vm649 = vcmask 223360
  %650 = vst.msk [vmem:[%s3 + $0x18] sm:$0x7] %vm649, %v644
  %651 = vrot.lane.b32.xlu0 %v516, 76
  %v652 = vpop.permute.xlu0 %651
  %653 = vrot.lane.b32.xlu0 %v518, 76
  %v654 = vpop.permute.xlu0 %653
  %vm657 = vcmask 326880
  %658 = vst.msk [vmem:[%s3 + $0x8] sm:$0xff] %vm657, %v652
  %vm659 = vcmask 321760
  %660 = vst.msk [vmem:[%s3 + $0x18] sm:$0x7] %vm659, %v654
  %661 = vrot.lane.b32.xlu0 %v516, 72
  %v662 = vpop.permute.xlu0 %661
  %663 = vrot.lane.b32.xlu0 %v518, 72
  %v664 = vpop.permute.xlu0 %663
  %vm667 = vcmask 425280
  %668 = vst.msk [vmem:[%s3 + $0x8] sm:$0xff] %vm667, %v662
  %vm669 = vcmask 420160
  %670 = vst.msk [vmem:[%s3 + $0x18] sm:$0x7] %vm669, %v664
  %671 = vrot.lane.b32.xlu0 %v516, 68
  %v672 = vpop.permute.xlu0 %671
  %673 = vrot.lane.b32.xlu0 %v518, 68
  %v674 = vpop.permute.xlu0 %673
  %vm677 = vcmask 523680
  %678 = vst.msk [vmem:[%s3 + $0x8] sm:$0xff] %vm677, %v672
  %vm679 = vcmask 518560
  %680 = vst.msk [vmem:[%s3 + $0x18] sm:$0x7] %vm679, %v674
  // Predicated region
  $region14: #{conv2d_gelu_pallas.1} parent=0 // pred_check
    _
  $region15: #{conv2d_gelu_pallas.1} parent=0 // pred_check_branch
    %682 = sbr.rel (0) target = $region17
  $region16: #{conv2d_gelu_pallas.1} parent=0 // pred_region
    _
  $region17: #{conv2d_gelu_pallas.1} parent=0 // pred_fallthru
    _
  // Predicated region
  $region18: #{conv2d_gelu_pallas.1} parent=0 // pred_check
    _
  $region19: #{conv2d_gelu_pallas.1} parent=0 // pred_check_branch
    %684 = sbr.rel (0) target = $region21
  $region20: #{conv2d_gelu_pallas.1} parent=0 // pred_region
    _
  $region21: #{conv2d_gelu_pallas.1} parent=0 // pred_fallthru
    _

</llo_original>
